<compile_context>
chip_gen: v5e
topology: v5e:2x2
jax: 0.10.0
libtpu: 0.0.40
codegen_flags: <defaults>
</compile_context>

<pallas_src>
import jax
import jax.numpy as jnp
from jax import lax
from jax.experimental import pallas as pl
from jax.experimental.pallas import tpu as pltpu

_LANE = 128
_MAX_BLOCK_ROWS = 1024  # (1024, 512) f32 tile = 2 MiB per buffer


def _mix1(x):
    # lowbias32 finalizer (good avalanche on sequential counters).
    x = x ^ (x >> 16)
    x = x * jnp.uint32(0x7FEB352D)
    x = x ^ (x >> 15)
    x = x * jnp.uint32(0x846CA68B)
    x = x ^ (x >> 16)
    return x


def _mix2(x):
    # murmur3 fmix32 finalizer (independent stream from _mix1).
    x = x ^ (x >> 16)
    x = x * jnp.uint32(0x85EBCA6B)
    x = x ^ (x >> 13)
    x = x * jnp.uint32(0xC2B2AE35)
    x = x ^ (x >> 16)
    return x


def _bits_to_uniform(bits):
    # Top 23 bits -> uniform in (0, 1); never exactly 0 (safe for log).
    mant = (bits >> 9).astype(jnp.int32).astype(jnp.float32)
    return (mant + 0.5) * jnp.float32(1.0 / 8388608.0)  # 2^-23


def _gaussian_noise_kernel(seed_ref, std_ref, x_ref, o_ref):
    """out = x + stddev * N(0,1), elementwise on one (bm, bn) VMEM tile."""
    bm, bn = x_ref.shape
    half = bn // 2  # bn is always a multiple of 128 -> even

    # Unique per-element counter across the whole grid (fresh noise per tile),
    # mixed with the per-call seed.
    row = lax.broadcasted_iota(jnp.int32, (bm, half), 0)
    col = lax.broadcasted_iota(jnp.int32, (bm, half), 1)
    base = pl.program_id(0) * (bm * half)
    cnt = (base + row * half + col).astype(jnp.uint32)
    cnt = cnt + seed_ref[0].astype(jnp.uint32) * jnp.uint32(0x9E3779B9)

    u1 = _bits_to_uniform(_mix1(cnt))
    u2 = _bits_to_uniform(_mix2(cnt))

    # Box-Muller, keeping BOTH outputs (halves transcendentals per element).
    r = jnp.sqrt(-2.0 * jnp.log(u1))
    theta = (2.0 * jnp.pi) * u2
    z = jnp.concatenate([r * jnp.cos(theta), r * jnp.sin(theta)], axis=-1)

    x = x_ref[...].astype(jnp.float32)
    o_ref[...] = (x + std_ref[0] * z).astype(o_ref.dtype)


def gaussian_noise(din, stddev, *, seed=0, training=True):
    """Pallas equivalent of GaussianNoise.forward.

    Pass a fresh `seed` per call (e.g. a step counter) to match torch.randn
    drawing new noise every forward.
    """
    if not training:
        return din  # eval mode: identity

    orig_shape = din.shape
    n = int(din.size)
    flat = din.reshape(-1)

    # Pick a lane width that divides n exactly (no pad / no extra HBM copies
    # for typical NCHW activations); fall back to a small pad otherwise.
    lanes = None
    for cand in (4 * _LANE, 2 * _LANE, _LANE):
        if n >= cand and n % cand == 0:
            lanes = cand
            break
    padded = n
    if lanes is None:
        lanes = _LANE
        padded = ((n + lanes - 1) // lanes) * lanes
        flat = jnp.pad(flat, (0, padded - n))

    rows = padded // lanes
    mat = flat.reshape(rows, lanes)

    if rows <= _MAX_BLOCK_ROWS:
        block_rows = rows            # full-extent block (exempt from 8-align)
    else:
        block_rows = _MAX_BLOCK_ROWS  # multiple of 8; last block may be ragged
    grid = (pl.cdiv(rows, block_rows),)

    seed_arr = jnp.asarray([seed], dtype=jnp.int32)
    std_arr = jnp.asarray([stddev], dtype=jnp.float32)

    out = pl.pallas_call(
        _gaussian_noise_kernel,
        out_shape=jax.ShapeDtypeStruct(mat.shape, mat.dtype),
        grid=grid,
        in_specs=[
            pl.BlockSpec(memory_space=pltpu.MemorySpace.SMEM),   # seed
            pl.BlockSpec(memory_space=pltpu.MemorySpace.SMEM),   # stddev
            pl.BlockSpec((block_rows, lanes), lambda i: (i, 0)),  # x tile
        ],
        out_specs=pl.BlockSpec((block_rows, lanes), lambda i: (i, 0)),
        compiler_params=pltpu.CompilerParams(
            dimension_semantics=("parallel",)),
    )(seed_arr, std_arr, mat)

    out_flat = out.reshape(-1)
    if padded != n:
        out_flat = out_flat[:n]
    return out_flat.reshape(orig_shape)


if __name__ == "__main__":
    key = jax.random.PRNGKey(0)
    # NCHW input, as the PyTorch module would receive from a conv stack.
    x = jax.random.normal(key, (2, 4, 16, 16), dtype=jnp.float32)
    stddev = 0.1

    # Training mode: noise added inside the Pallas kernel.
    y_train = gaussian_noise(x, stddev, seed=1234, training=True)
    y_train = jax.block_until_ready(y_train)

    # Eval mode: identity.
    y_eval = gaussian_noise(x, stddev, training=False)
    y_eval = jax.block_until_ready(y_eval)

    # Sanity checks: shapes preserved, eval is identity, noise magnitude sane.
    assert y_train.shape == x.shape
    assert y_train.dtype == x.dtype
    assert jnp.allclose(y_eval, x)
    noise = (y_train - x).astype(jnp.float32)
    assert float(jnp.abs(noise).max()) > 0.0
    assert abs(float(noise.mean())) < 0.02
    assert abs(float(noise.std()) - stddev) < 0.05

    print("KERNEL_OK")
</pallas_src>

<mosaic_0001>
module attributes {stable_mosaic.version = 11 : i64} {
  func.func @_gaussian_noise_kernel(%arg0: i32, %arg1: memref<1xi32, #tpu.memory_space<smem>>, %arg2: memref<1xf32, #tpu.memory_space<smem>>, %arg3: memref<4x512xf32, #tpu.memory_space<vmem>>, %arg4: memref<4x512xf32, #tpu.memory_space<vmem>>) attributes {dimension_semantics = [#tpu.dimension_semantics<parallel>], iteration_bounds = array<i64: 1>, scalar_prefetch = 0 : i64, scratch_operands = 0 : i64, tpu.core_type = #tpu.core_type<tc>, window_params = [{transform_indices = @transform_0, window_bounds = array<i64: 1>}, {transform_indices = @transform_1, window_bounds = array<i64: 1>}, {transform_indices = @transform_2, window_bounds = array<i64: 4, 512>}, {transform_indices = @transform_3, window_bounds = array<i64: 4, 512>}]} {
    %0 = tpu.iota {dimensions = array<i32: 0>} : vector<4x256xi32>
    %1 = tpu.iota {dimensions = array<i32: 1>} : vector<4x256xi32>
    %c1024_i32 = arith.constant 1024 : i32
    %2 = arith.muli %arg0, %c1024_i32 : i32
    %c256_i32 = arith.constant 256 : i32
    %3 = vector.broadcast %c256_i32 : i32 to vector<4x256xi32>
    %4 = arith.muli %0, %3 : vector<4x256xi32>
    %5 = vector.broadcast %2 : i32 to vector<4x256xi32>
    %6 = arith.addi %5, %4 : vector<4x256xi32>
    %7 = arith.addi %6, %1 : vector<4x256xi32>
    %c0 = arith.constant 0 : index
    %8 = memref.load %arg1[%c0] : memref<1xi32, #tpu.memory_space<smem>>
    %c-1640531527_i32 = arith.constant -1640531527 : i32
    %9 = arith.muli %8, %c-1640531527_i32 : i32
    %10 = vector.broadcast %9 : i32 to vector<4x256xi32>
    %11 = arith.addi %7, %10 : vector<4x256xi32>
    %c16_i32 = arith.constant 16 : i32
    %12 = vector.broadcast %c16_i32 : i32 to vector<4x256xi32>
    %13 = arith.shrui %11, %12 : vector<4x256xi32>
    %14 = arith.xori %11, %13 : vector<4x256xi32>
    %c2146121005_i32 = arith.constant 2146121005 : i32
    %15 = vector.broadcast %c2146121005_i32 : i32 to vector<4x256xi32>
    %16 = arith.muli %14, %15 : vector<4x256xi32>
    %c15_i32 = arith.constant 15 : i32
    %17 = vector.broadcast %c15_i32 : i32 to vector<4x256xi32>
    %18 = arith.shrui %16, %17 : vector<4x256xi32>
    %19 = arith.xori %16, %18 : vector<4x256xi32>
    %c-2073254261_i32 = arith.constant -2073254261 : i32
    %20 = vector.broadcast %c-2073254261_i32 : i32 to vector<4x256xi32>
    %21 = arith.muli %19, %20 : vector<4x256xi32>
    %c16_i32_0 = arith.constant 16 : i32
    %22 = vector.broadcast %c16_i32_0 : i32 to vector<4x256xi32>
    %23 = arith.shrui %21, %22 : vector<4x256xi32>
    %24 = arith.xori %21, %23 : vector<4x256xi32>
    %c9_i32 = arith.constant 9 : i32
    %25 = vector.broadcast %c9_i32 : i32 to vector<4x256xi32>
    %26 = arith.shrui %24, %25 : vector<4x256xi32>
    %27 = arith.sitofp %26 : vector<4x256xi32> to vector<4x256xf32>
    %cst = arith.constant 5.000000e-01 : f32
    %28 = vector.broadcast %cst : f32 to vector<4x256xf32>
    %29 = arith.addf %27, %28 : vector<4x256xf32>
    %cst_1 = arith.constant 1.1920929E-7 : f32
    %30 = vector.broadcast %cst_1 : f32 to vector<4x256xf32>
    %31 = arith.mulf %29, %30 : vector<4x256xf32>
    %c16_i32_2 = arith.constant 16 : i32
    %32 = vector.broadcast %c16_i32_2 : i32 to vector<4x256xi32>
    %33 = arith.shrui %11, %32 : vector<4x256xi32>
    %34 = arith.xori %11, %33 : vector<4x256xi32>
    %c-2048144789_i32 = arith.constant -2048144789 : i32
    %35 = vector.broadcast %c-2048144789_i32 : i32 to vector<4x256xi32>
    %36 = arith.muli %34, %35 : vector<4x256xi32>
    %c13_i32 = arith.constant 13 : i32
    %37 = vector.broadcast %c13_i32 : i32 to vector<4x256xi32>
    %38 = arith.shrui %36, %37 : vector<4x256xi32>
    %39 = arith.xori %36, %38 : vector<4x256xi32>
    %c-1028477387_i32 = arith.constant -1028477387 : i32
    %40 = vector.broadcast %c-1028477387_i32 : i32 to vector<4x256xi32>
    %41 = arith.muli %39, %40 : vector<4x256xi32>
    %c16_i32_3 = arith.constant 16 : i32
    %42 = vector.broadcast %c16_i32_3 : i32 to vector<4x256xi32>
    %43 = arith.shrui %41, %42 : vector<4x256xi32>
    %44 = arith.xori %41, %43 : vector<4x256xi32>
    %c9_i32_4 = arith.constant 9 : i32
    %45 = vector.broadcast %c9_i32_4 : i32 to vector<4x256xi32>
    %46 = arith.shrui %44, %45 : vector<4x256xi32>
    %47 = arith.sitofp %46 : vector<4x256xi32> to vector<4x256xf32>
    %cst_5 = arith.constant 5.000000e-01 : f32
    %48 = vector.broadcast %cst_5 : f32 to vector<4x256xf32>
    %49 = arith.addf %47, %48 : vector<4x256xf32>
    %cst_6 = arith.constant 1.1920929E-7 : f32
    %50 = vector.broadcast %cst_6 : f32 to vector<4x256xf32>
    %51 = arith.mulf %49, %50 : vector<4x256xf32>
    %52 = math.log %31 : vector<4x256xf32>
    %cst_7 = arith.constant -2.000000e+00 : f32
    %53 = vector.broadcast %cst_7 : f32 to vector<4x256xf32>
    %54 = arith.mulf %53, %52 : vector<4x256xf32>
    %55 = math.sqrt %54 : vector<4x256xf32>
    %cst_8 = arith.constant 6.28318548 : f32
    %56 = vector.broadcast %cst_8 : f32 to vector<4x256xf32>
    %57 = arith.mulf %56, %51 : vector<4x256xf32>
    %58 = math.cos %57 : vector<4x256xf32>
    %59 = arith.mulf %55, %58 : vector<4x256xf32>
    %60 = math.sin %57 : vector<4x256xf32>
    %61 = arith.mulf %55, %60 : vector<4x256xf32>
    %62 = tpu.concatenate %59, %61 in 1 : vector<4x256xf32>, vector<4x256xf32> -> vector<4x512xf32>
    %c0_9 = arith.constant 0 : index
    %c0_10 = arith.constant 0 : index
    %63 = vector.load %arg3[%c0_9, %c0_10] : memref<4x512xf32, #tpu.memory_space<vmem>>, vector<4x512xf32>
    %c0_11 = arith.constant 0 : index
    %64 = memref.load %arg2[%c0_11] : memref<1xf32, #tpu.memory_space<smem>>
    %65 = vector.broadcast %64 : f32 to vector<4x512xf32>
    %66 = arith.mulf %65, %62 : vector<4x512xf32>
    %67 = arith.addf %63, %66 : vector<4x512xf32>
    %c0_12 = arith.constant 0 : index
    %c0_13 = arith.constant 0 : index
    %68 = vector.load %arg4[%c0_12, %c0_13] : memref<4x512xf32, #tpu.memory_space<vmem>>, vector<4x512xf32>
    tpu.vector_store %arg4[%c0_12, %c0_13], %67 {strides = array<i32>} : memref<4x512xf32, #tpu.memory_space<vmem>>, vector<4x512xf32>,
    return
  }
  func.func @transform_0(%arg0: i32) -> i32 {
    %c0_i32 = arith.constant 0 : i32
    %c0_i32_0 = arith.constant 0 : i32
    return %c0_i32 : i32
  }
  func.func @transform_1(%arg0: i32) -> i32 {
    %c0_i32 = arith.constant 0 : i32
    %c0_i32_0 = arith.constant 0 : i32
    return %c0_i32 : i32
  }
  func.func @transform_2(%arg0: i32) -> (i32, i32) {
    %c0_i32 = arith.constant 0 : i32
    %c0_i32_0 = arith.constant 0 : i32
    return %arg0, %c0_i32 : i32, i32
  }
  func.func @transform_3(%arg0: i32) -> (i32, i32) {
    %c0_i32 = arith.constant 0 : i32
    %c0_i32_0 = arith.constant 0 : i32
    return %arg0, %c0_i32 : i32, i32
  }
}

</mosaic_0001>

<llo_original>
// kernel: tpu_custom_call.1
$region0: #{tpu_custom_call.1}
  #allocation0 [shape = 'u32[]', space=smem, size = 0x4, offset = 0x4, fixed_abs, tag = 'smem constant byte address 0x4 - core index']
  #allocation1 [shape = 'u32[72,128]{1,0:T(1,128)}', space=vmem, size = 0x9000, scoped, tag = 'internal scratch']
  #allocation2 [shape = 's32[1]{0:T(128)S(6)}', space=smem, size = 0x200, scoped, tag = 'scoped memory for tpu_custom_call.1']
  #allocation3 [shape = 'f32[1]{0:T(128)S(6)}', space=smem, size = 0x200, scoped, tag = 'scoped memory for tpu_custom_call.1']
  %s0 = inlined_call_operand.<no memory space> [shape: s32[1], index: 0, kind: input, shape index: {}]
  %s1 = inlined_call_operand.<no memory space> [shape: f32[1], index: 1, kind: input, shape index: {}]
  %s2 = inlined_call_operand.hbm [shape: f32[4,512], index: 2, kind: input, shape index: {}]
  %s3 = inlined_call_operand.hbm [shape: f32[4,512], index: 3, kind: output, shape index: {}]
  %s4 = sld [smem:[#allocation0]]
  $region26: #{tpu_custom_call.1} parent=0
    _
  %s6 = ssub.s32 1, %s4
  %s7 = scalar_select 0, %s6, %s4
  %8 = sst [smem:[#allocation2]] %s0
  %9 = sst [smem:[#allocation3]] %s1
  $region1: #{tpu_custom_call.1} parent=0
    #allocation4 [shape = 'u8[8192]{0}', space=vmem, size = 0x2000, scoped, tag = 'input window, operand 2, single buffered']
    #allocation5 [shape = 's32[1]{0}', space=sflag, size = 0x4, scoped, tag = 'scoped memory for tpu_custom_call.1']
    #allocation6 [shape = 's32[1]{0}', space=sflag, size = 0x4, scoped, tag = 'scoped memory for tpu_custom_call.1']
    #allocation7 [shape = 'u8[8192]{0}', space=vmem, size = 0x2000, scoped, tag = 'output window, operand 0, single buffered']
    %10 = vsyncpa [#allocation5], 0
    %11 = vsyncpa [#allocation6], 0
    // Predicated region
    $region2: #{tpu_custom_call.1} parent=1 // pred_check
      _
    $region3: #{tpu_custom_call.1} parent=1 // pred_check_branch
      %13 = sbr.rel (0) target = $region5
    $region4: #{tpu_custom_call.1} parent=1 // pred_region
      _
    $region5: #{tpu_custom_call.1} parent=1 // pred_fallthru
      _
    // Predicated region
    $region6: #{tpu_custom_call.1} parent=1 // pred_check
      _
    $region7: #{tpu_custom_call.1} parent=1 // pred_check_branch
      %15 = sbr.rel (0) target = $region9
    $region8: #{tpu_custom_call.1} parent=1 // pred_region
      _
    $region9: #{tpu_custom_call.1} parent=1 // pred_fallthru
      _
    // Predicated region
    $region10: #{tpu_custom_call.1} parent=1 // pred_check
      _
    $region11: #{tpu_custom_call.1} parent=1 // pred_check_branch
      %17 = sbr.rel (0) target = $region13
    $region12: #{tpu_custom_call.1} parent=1 // pred_region
      %19 = vsyncadd [#allocation5], 0
      %s21 = sshll.u32 %s2, 4
      %s22 = int_to_ptr.hbm [resolvable:$true] %s21
      %s23 = sshll.u32 [#allocation4], 4
      %s24 = int_to_ptr.vmem [resolvable:$true] %s23
      %26 = dma.hbm_to_vmem [thread:$0]  %s22, 256, %s24, [#allocation5]
    $region13: #{tpu_custom_call.1} parent=1 // pred_fallthru
      _
    // Predicated region
    $region14: #{tpu_custom_call.1} parent=1 // pred_check
      _
    $region15: #{tpu_custom_call.1} parent=1 // pred_check_branch
      %28 = sbr.rel (0) target = $region17
    $region16: #{tpu_custom_call.1} parent=1 // pred_region
      %30 = dma.done [#allocation5], 256
    $region17: #{tpu_custom_call.1} parent=1 // pred_fallthru
      _
    %v31 = vlaneseq
    %v32 = vshrl.u32 %v31, 7
    %v33 = vlaneseq
    %v34 = vand.u32 %v33, 127
    %v35 = vadd.s32 %v34, 128
    %s36 = smul.u32 0, 1024
    %v37 = vmul.u32 %v32, 256
    %v38 = vstv %s36
    %v39 = vadd.s32 %v38, %v37
    %v40 = vadd.s32 %v39, %v34
    %v41 = vadd.s32 %v39, %v35
    %s42 = sld [smem:[#allocation2]]
    %s43 = smul.u32 %s42, 2654435769
    %v44 = vstv %s43
    %v45 = vadd.s32 %v40, %v44
    %v46 = vadd.s32 %v41, %v44
    %v47 = vshrl.u32 %v45, 16
    %v48 = vshrl.u32 %v46, 16
    %v49 = vxor.u32 %v45, %v47
    %v50 = vxor.u32 %v46, %v48
    %v51 = vmul.u32 %v49, 2146121005
    %v52 = vmul.u32 %v50, 2146121005
    %v53 = vshrl.u32 %v51, 15
    %v54 = vshrl.u32 %v52, 15
    %v55 = vxor.u32 %v51, %v53
    %v56 = vxor.u32 %v52, %v54
    %v57 = vmul.u32 %v55, 2221713035
    %v58 = vmul.u32 %v56, 2221713035
    %v59 = vshrl.u32 %v57, 16
    %v60 = vshrl.u32 %v58, 16
    %v61 = vxor.u32 %v57, %v59
    %v62 = vxor.u32 %v58, %v60
    %v63 = vshrl.u32 %v61, 9
    %v64 = vshrl.u32 %v62, 9
    %v65 = vcvt.s32.f32 %v63
    %v66 = vcvt.s32.f32 %v64
    %v67 = vadd.f32 %v65, 0.5
    %v68 = vadd.f32 %v66, 0.5
    %v69 = vmul.f32 %v67, 1.1920929e-07
    %v70 = vmul.f32 %v68, 1.1920929e-07
    %v71 = vmul.u32 %v49, 2246822507
    %v72 = vmul.u32 %v50, 2246822507
    %v73 = vshrl.u32 %v71, 13
    %v74 = vshrl.u32 %v72, 13
    %v75 = vxor.u32 %v71, %v73
    %v76 = vxor.u32 %v72, %v74
    %v77 = vmul.u32 %v75, 3266489909
    %v78 = vmul.u32 %v76, 3266489909
    %v79 = vshrl.u32 %v77, 16
    %v80 = vshrl.u32 %v78, 16
    %v81 = vxor.u32 %v77, %v79
    %v82 = vxor.u32 %v78, %v80
    %v83 = vshrl.u32 %v81, 9
    %v84 = vshrl.u32 %v82, 9
    %v85 = vcvt.s32.f32 %v83
    %v86 = vcvt.s32.f32 %v84
    %v87 = vadd.f32 %v85, 0.5
    %v88 = vadd.f32 %v86, 0.5
    %v89 = vmul.f32 %v87, 1.1920929e-07
    %v90 = vmul.f32 %v88, 1.1920929e-07
    %v91 = vlog2.pop %v69
    %v92 = vmul.f32 %v91, 0.6931472
    %v93 = vlog2.pop %v70
    %v94 = vmul.f32 %v93, 0.6931472
    %v95 = vmul.f32 %v92, -2.0
    %v96 = vmul.f32 %v94, -2.0
    %v97 = vrsqrt.pop %v95
    %v98 = vmul.f32 %v97, %v95
    %v99 = vmul.f32 %v98, %v97
    %v100 = vmul.f32 0.5, %v99
    %v101 = vsub.f32 1.5, %v100
    %v102 = vmul.f32 %v97, %v101
    %v103 = vmul.f32 %v95, %v102
    %vm104 = vcmp.eq.f32.partialorder %v95, inf
    %v105 = vsel %vm104, %v95, %v103
    %vm106 = vcmp.eq.f32.partialorder %v95, 0.0
    %v107 = vand.u32 %v95, 2147483648
    %v108 = vsel %vm106, %v107, %v105
    %v109 = vrsqrt.pop %v96
    %v110 = vmul.f32 %v109, %v96
    %v111 = vmul.f32 %v110, %v109
    %v112 = vmul.f32 0.5, %v111
    %v113 = vsub.f32 1.5, %v112
    %v114 = vmul.f32 %v109, %v113
    %v115 = vmul.f32 %v96, %v114
    %vm116 = vcmp.eq.f32.partialorder %v96, inf
    %v117 = vsel %vm116, %v96, %v115
    %vm118 = vcmp.eq.f32.partialorder %v96, 0.0
    %v119 = vand.u32 %v96, 2147483648
    %v120 = vsel %vm118, %v119, %v117
    %v121 = vmul.f32 %v89, 6.2831855
    %v122 = vmul.f32 %v90, 6.2831855
    %v123 = vand.u32 2147483647, %v121
    %vm124 = vcmp.le.f32.partialorder %v123, 0.7853982
    %vm125 = vcmp.lt.s32.totalorder %v121, 0
    %v126 = vand.u32 %v121, 2139095040
    %v127 = vshrl.u32 %v126, 23
    %v128 = vsub.s32 %v127, 127
    %v129 = vand.u32 2147483647, %v121
    %v130 = vand.u32 %v129, 8388607
    %v131 = vor.u32 %v130, 8388608
    %v132 = vsub.s32 0, %v131
    %v133 = vadd.s32 %v128, 1
    %vm134 = vcmp.gt.s32.totalorder %v133, 0
    %v135 = vsel %vm134, %v133, 0
    %v136 = vshrl.u32 %v135, 5
    %v137 = vand.u32 %v135, 31
    %v138 = vsub.s32 32, %v137
    %v139 = vshrl.u32 683565275, %v138
    %v140 = vshll.u32 683565275, %v137
    %v141 = vshrl.u32 2475754826, %v138
    %v142 = vor.u32 %v140, %v141
    %v143 = vshll.u32 2475754826, %v137
    %v144 = vshrl.u32 2131351028, %v138
    %v145 = vor.u32 %v143, %v144
    %v146 = vshll.u32 2131351028, %v137
    %v147 = vshrl.u32 2102212464, %v138
    %v148 = vor.u32 %v146, %v147
    %v149 = vshll.u32 2102212464, %v137
    %v150 = vshrl.u32 920167782, %v138
    %v151 = vor.u32 %v149, %v150
    %v152 = vshll.u32 920167782, %v137
    %v153 = vshrl.u32 1326507024, %v138
    %v154 = vor.u32 %v152, %v153
    %vm155 = vcmp.lt.s32.totalorder %v136, 1
    %vm156 = vcmp.lt.s32.totalorder %v136, 2
    %vm157 = vcmp.lt.s32.totalorder %v136, 3
    %vm158 = vcmp.lt.s32.totalorder %v136, 4
    %v159 = vsel %vm155, %v139, %v142
    %v160 = vsel %vm158, %v148, 2102212464
    %v161 = vsel %vm157, %v145, %v160
    %v162 = vsel %vm156, %v159, %v161
    %v163 = vsel %vm155, %v142, %v145
    %v164 = vsel %vm158, %v151, 920167782
    %v165 = vsel %vm157, %v148, %v164
    %v166 = vsel %vm156, %v163, %v165
    %v167 = vsel %vm155, %v145, %v148
    %v168 = vsel %vm158, %v154, 1326507024
    %v169 = vsel %vm157, %v151, %v168
    %v170 = vsel %vm156, %v167, %v169
    %v171 = vshll.u32 %v131, 8
    %v172 = vand.u32 %v171, 65535
    %v173 = vshrl.u32 %v171, 16
    %v174 = vand.u32 %v170, 65535
    %v175 = vshrl.u32 %v170, 16
    %v176 = vmul.u32 %v172, %v174
    %v177 = vmul.u32 %v172, %v175
    %v178 = vmul.u32 %v173, %v174
    %v179 = vmul.u32 %v173, %v175
    %v180 = vshll.u32 %v177, 16
    %v181 = vshrl.u32 %v177, 16
    %v182 = vshll.u32 %v178, 16
    %v183 = vshrl.u32 %v178, 16
    %vm184 = vc.u32 %v176, %v180
    %v185 = vsel %vm184, 1, 0
    %v186 = vadd.s32 %v176, %v180
    %v187 = vadd.s32 %v179, %v185
    %vm188 = vc.u32 %v186, %v182
    %v189 = vsel %vm188, 1, 0
    %v190 = vadd.s32 %v186, %v182
    %v191 = vadd.s32 %v187, %v189
    %v192 = vadd.s32 %v191, %v181
    %v193 = vadd.s32 %v192, %v183
    %v194 = vand.u32 %v171, 65535
    %v195 = vshrl.u32 %v171, 16
    %v196 = vand.u32 %v166, 65535
    %v197 = vshrl.u32 %v166, 16
    %v198 = vmul.u32 %v194, %v196
    %v199 = vmul.u32 %v194, %v197
    %v200 = vmul.u32 %v195, %v196
    %v201 = vmul.u32 %v195, %v197
    %v202 = vshll.u32 %v199, 16
    %v203 = vshrl.u32 %v199, 16
    %v204 = vshll.u32 %v200, 16
    %v205 = vshrl.u32 %v200, 16
    %vm206 = vc.u32 %v198, %v202
    %v207 = vsel %vm206, 1, 0
    %v208 = vadd.s32 %v198, %v202
    %v209 = vadd.s32 %v201, %v207
    %vm210 = vc.u32 %v208, %v204
    %v211 = vsel %vm210, 1, 0
    %v212 = vadd.s32 %v208, %v204
    %v213 = vadd.s32 %v209, %v211
    %v214 = vadd.s32 %v213, %v203
    %v215 = vadd.s32 %v214, %v205
    %v216 = vmul.u32 %v171, %v162
    %v217 = vadd.s32 %v193, %v212
    %vm218 = vc.u32 %v193, %v212
    %v219 = vadd.s32 %v215, 1
    %v220 = vsel %vm218, %v219, %v215
    %v221 = vadd.s32 %v216, %v220
    %v222 = vadd.s32 %v221, 536870912
    %v223 = vshrl.u32 %v222, 30
    %v224 = vshll.u32 %v223, 30
    %v225 = vsub.s32 %v221, %v224
    %vm226 = vcmp.lt.s32.totalorder %v225, 0
    %v227 = vsub.s32 0, %v225
    %v228 = vsel %vm226, %v227, %v225
    %v229 = vclz %v228
    %v230 = vsub.s32 %v229, 2
    %vm231 = vcmp.gt.s32.totalorder 0, %v230
    %v232 = vsel %vm231, 0, %v230
    %v233 = vsub.s32 32, %v232
    %v234 = vshll.u32 %v225, %v232
    %v235 = vshrl.u32 %v217, %v233
    %v236 = vor.u32 %v234, %v235
    %v237 = vsub.s32 4294967266, %v232
    %v238 = vadd.s32 %v237, 127
    %v239 = vshll.u32 %v238, 23
    %v240 = vor.u32 4788187, %v239
    %v241 = vand.u32 2147483647, %v240
    %v243 = vcvt.s32.f32 %v236
    %v244 = vmul.f32 %v243, %v241
    %v245 = vxor.u32 %v244, 2147483648
    %v246 = vsel %vm125, %v245, %v244
    %v247 = vsub.s32 4, %v223
    %v248 = vsel %vm125, %v247, %v223
    %v249 = vsel %vm124, %v121, %v246
    %v250 = vsel %vm124, 0, %v248
    %v251 = vmul.f32 %v249, %v249
    %v252 = vmul.f32 %v251, -0.001358992
    %v253 = vadd.f32 %v252, 0.041655596
    %v254 = vmul.f32 %v251, %v253
    %v255 = vadd.f32 %v254, -0.4999988
    %v256 = vmul.f32 %v251, %v255
    %v257 = vadd.f32 1.0, %v256
    %v258 = vmul.f32 %v249, %v249
    %v259 = vmul.f32 %v258, -0.00019511016
    %v260 = vadd.f32 %v259, 0.008332121
    %v261 = vmul.f32 %v258, %v260
    %v262 = vadd.f32 %v261, -0.16666654
    %v263 = vmul.f32 %v258, %v262
    %v264 = vadd.f32 %v263, 1.0
    %v265 = vmul.f32 %v264, %v249
    %vm266 = vweird.f32 %v121
    %v267 = vand.u32 %v250, 3
    %vm268 = vcmp.lt.s32.totalorder %v267, 2
    %vm269 = vcmp.eq.s32.totalorder %v267, 0
    %v270 = vxor.u32 %v265, 2147483648
    %v271 = vsel %vm269, %v257, %v270
    %vm272 = vcmp.eq.s32.totalorder %v267, 2
    %v273 = vxor.u32 %v257, 2147483648
    %v274 = vsel %vm272, %v273, %v265
    %v275 = vsel %vm268, %v271, %v274
    %v276 = vsel %vm266, nan, %v275
    %v277 = vand.u32 2147483647, %v122
    %vm278 = vcmp.le.f32.partialorder %v277, 0.7853982
    %vm279 = vcmp.lt.s32.totalorder %v122, 0
    %v280 = vand.u32 %v122, 2139095040
    %v281 = vshrl.u32 %v280, 23
    %v282 = vsub.s32 %v281, 127
    %v283 = vand.u32 2147483647, %v122
    %v284 = vand.u32 %v283, 8388607
    %v285 = vor.u32 %v284, 8388608
    %v286 = vsub.s32 0, %v285
    %v287 = vadd.s32 %v282, 1
    %vm288 = vcmp.gt.s32.totalorder %v287, 0
    %v289 = vsel %vm288, %v287, 0
    %v290 = vshrl.u32 %v289, 5
    %v291 = vand.u32 %v289, 31
    %v292 = vsub.s32 32, %v291
    %v293 = vshrl.u32 683565275, %v292
    %v294 = vshll.u32 683565275, %v291
    %v295 = vshrl.u32 2475754826, %v292
    %v296 = vor.u32 %v294, %v295
    %v297 = vshll.u32 2475754826, %v291
    %v298 = vshrl.u32 2131351028, %v292
    %v299 = vor.u32 %v297, %v298
    %v300 = vshll.u32 2131351028, %v291
    %v301 = vshrl.u32 2102212464, %v292
    %v302 = vor.u32 %v300, %v301
    %v303 = vshll.u32 2102212464, %v291
    %v304 = vshrl.u32 920167782, %v292
    %v305 = vor.u32 %v303, %v304
    %v306 = vshll.u32 920167782, %v291
    %v307 = vshrl.u32 1326507024, %v292
    %v308 = vor.u32 %v306, %v307
    %vm309 = vcmp.lt.s32.totalorder %v290, 1
    %vm310 = vcmp.lt.s32.totalorder %v290, 2
    %vm311 = vcmp.lt.s32.totalorder %v290, 3
    %vm312 = vcmp.lt.s32.totalorder %v290, 4
    %v313 = vsel %vm309, %v293, %v296
    %v314 = vsel %vm312, %v302, 2102212464
    %v315 = vsel %vm311, %v299, %v314
    %v316 = vsel %vm310, %v313, %v315
    %v317 = vsel %vm309, %v296, %v299
    %v318 = vsel %vm312, %v305, 920167782
    %v319 = vsel %vm311, %v302, %v318
    %v320 = vsel %vm310, %v317, %v319
    %v321 = vsel %vm309, %v299, %v302
    %v322 = vsel %vm312, %v308, 1326507024
    %v323 = vsel %vm311, %v305, %v322
    %v324 = vsel %vm310, %v321, %v323
    %v325 = vshll.u32 %v285, 8
    %v326 = vand.u32 %v325, 65535
    %v327 = vshrl.u32 %v325, 16
    %v328 = vand.u32 %v324, 65535
    %v329 = vshrl.u32 %v324, 16
    %v330 = vmul.u32 %v326, %v328
    %v331 = vmul.u32 %v326, %v329
    %v332 = vmul.u32 %v327, %v328
    %v333 = vmul.u32 %v327, %v329
    %v334 = vshll.u32 %v331, 16
    %v335 = vshrl.u32 %v331, 16
    %v336 = vshll.u32 %v332, 16
    %v337 = vshrl.u32 %v332, 16
    %vm338 = vc.u32 %v330, %v334
    %v339 = vsel %vm338, 1, 0
    %v340 = vadd.s32 %v330, %v334
    %v341 = vadd.s32 %v333, %v339
    %vm342 = vc.u32 %v340, %v336
    %v343 = vsel %vm342, 1, 0
    %v344 = vadd.s32 %v340, %v336
    %v345 = vadd.s32 %v341, %v343
    %v346 = vadd.s32 %v345, %v335
    %v347 = vadd.s32 %v346, %v337
    %v348 = vand.u32 %v325, 65535
    %v349 = vshrl.u32 %v325, 16
    %v350 = vand.u32 %v320, 65535
    %v351 = vshrl.u32 %v320, 16
    %v352 = vmul.u32 %v348, %v350
    %v353 = vmul.u32 %v348, %v351
    %v354 = vmul.u32 %v349, %v350
    %v355 = vmul.u32 %v349, %v351
    %v356 = vshll.u32 %v353, 16
    %v357 = vshrl.u32 %v353, 16
    %v358 = vshll.u32 %v354, 16
    %v359 = vshrl.u32 %v354, 16
    %vm360 = vc.u32 %v352, %v356
    %v361 = vsel %vm360, 1, 0
    %v362 = vadd.s32 %v352, %v356
    %v363 = vadd.s32 %v355, %v361
    %vm364 = vc.u32 %v362, %v358
    %v365 = vsel %vm364, 1, 0
    %v366 = vadd.s32 %v362, %v358
    %v367 = vadd.s32 %v363, %v365
    %v368 = vadd.s32 %v367, %v357
    %v369 = vadd.s32 %v368, %v359
    %v370 = vmul.u32 %v325, %v316
    %v371 = vadd.s32 %v347, %v366
    %vm372 = vc.u32 %v347, %v366
    %v373 = vadd.s32 %v369, 1
    %v374 = vsel %vm372, %v373, %v369
    %v375 = vadd.s32 %v370, %v374
    %v376 = vadd.s32 %v375, 536870912
    %v377 = vshrl.u32 %v376, 30
    %v378 = vshll.u32 %v377, 30
    %v379 = vsub.s32 %v375, %v378
    %vm380 = vcmp.lt.s32.totalorder %v379, 0
    %v381 = vsub.s32 0, %v379
    %v382 = vsel %vm380, %v381, %v379
    %v383 = vclz %v382
    %v384 = vsub.s32 %v383, 2
    %vm385 = vcmp.gt.s32.totalorder 0, %v384
    %v386 = vsel %vm385, 0, %v384
    %v387 = vsub.s32 32, %v386
    %v388 = vshll.u32 %v379, %v386
    %v389 = vshrl.u32 %v371, %v387
    %v390 = vor.u32 %v388, %v389
    %v391 = vsub.s32 4294967266, %v386
    %v392 = vadd.s32 %v391, 127
    %v393 = vshll.u32 %v392, 23
    %v394 = vor.u32 4788187, %v393
    %v395 = vand.u32 2147483647, %v394
    %v397 = vcvt.s32.f32 %v390
    %v398 = vmul.f32 %v397, %v395
    %v399 = vxor.u32 %v398, 2147483648
    %v400 = vsel %vm279, %v399, %v398
    %v401 = vsub.s32 4, %v377
    %v402 = vsel %vm279, %v401, %v377
    %v403 = vsel %vm278, %v122, %v400
    %v404 = vsel %vm278, 0, %v402
    %v405 = vmul.f32 %v403, %v403
    %v406 = vmul.f32 %v405, -0.001358992
    %v407 = vadd.f32 %v406, 0.041655596
    %v408 = vmul.f32 %v405, %v407
    %v409 = vadd.f32 %v408, -0.4999988
    %v410 = vmul.f32 %v405, %v409
    %v411 = vadd.f32 1.0, %v410
    %v412 = vmul.f32 %v403, %v403
    %v413 = vmul.f32 %v412, -0.00019511016
    %v414 = vadd.f32 %v413, 0.008332121
    %v415 = vmul.f32 %v412, %v414
    %v416 = vadd.f32 %v415, -0.16666654
    %v417 = vmul.f32 %v412, %v416
    %v418 = vadd.f32 %v417, 1.0
    %v419 = vmul.f32 %v418, %v403
    %vm420 = vweird.f32 %v122
    %v421 = vand.u32 %v404, 3
    %vm422 = vcmp.lt.s32.totalorder %v421, 2
    %vm423 = vcmp.eq.s32.totalorder %v421, 0
    %v424 = vxor.u32 %v419, 2147483648
    %v425 = vsel %vm423, %v411, %v424
    %vm426 = vcmp.eq.s32.totalorder %v421, 2
    %v427 = vxor.u32 %v411, 2147483648
    %v428 = vsel %vm426, %v427, %v419
    %v429 = vsel %vm422, %v425, %v428
    %v430 = vsel %vm420, nan, %v429
    %v431 = vmul.f32 %v108, %v276
    %v432 = vmul.f32 %v120, %v430
    %v433 = vand.u32 2147483647, %v121
    %vm434 = vcmp.le.f32.partialorder %v433, 0.7853982
    %vm435 = vcmp.lt.s32.totalorder %v121, 0
    %v436 = vand.u32 %v121, 2139095040
    %v437 = vshrl.u32 %v436, 23
    %v438 = vsub.s32 %v437, 127
    %v439 = vand.u32 2147483647, %v121
    %v440 = vand.u32 %v439, 8388607
    %v441 = vor.u32 %v440, 8388608
    %v442 = vsub.s32 0, %v441
    %v443 = vadd.s32 %v438, 1
    %vm444 = vcmp.gt.s32.totalorder %v443, 0
    %v445 = vsel %vm444, %v443, 0
    %v446 = vshrl.u32 %v445, 5
    %v447 = vand.u32 %v445, 31
    %v448 = vsub.s32 32, %v447
    %v449 = vshrl.u32 683565275, %v448
    %v450 = vshll.u32 683565275, %v447
    %v451 = vshrl.u32 2475754826, %v448
    %v452 = vor.u32 %v450, %v451
    %v453 = vshll.u32 2475754826, %v447
    %v454 = vshrl.u32 2131351028, %v448
    %v455 = vor.u32 %v453, %v454
    %v456 = vshll.u32 2131351028, %v447
    %v457 = vshrl.u32 2102212464, %v448
    %v458 = vor.u32 %v456, %v457
    %v459 = vshll.u32 2102212464, %v447
    %v460 = vshrl.u32 920167782, %v448
    %v461 = vor.u32 %v459, %v460
    %v462 = vshll.u32 920167782, %v447
    %v463 = vshrl.u32 1326507024, %v448
    %v464 = vor.u32 %v462, %v463
    %vm465 = vcmp.lt.s32.totalorder %v446, 1
    %vm466 = vcmp.lt.s32.totalorder %v446, 2
    %vm467 = vcmp.lt.s32.totalorder %v446, 3
    %vm468 = vcmp.lt.s32.totalorder %v446, 4
    %v469 = vsel %vm465, %v449, %v452
    %v470 = vsel %vm468, %v458, 2102212464
    %v471 = vsel %vm467, %v455, %v470
    %v472 = vsel %vm466, %v469, %v471
    %v473 = vsel %vm465, %v452, %v455
    %v474 = vsel %vm468, %v461, 920167782
    %v475 = vsel %vm467, %v458, %v474
    %v476 = vsel %vm466, %v473, %v475
    %v477 = vsel %vm465, %v455, %v458
    %v478 = vsel %vm468, %v464, 1326507024
    %v479 = vsel %vm467, %v461, %v478
    %v480 = vsel %vm466, %v477, %v479
    %v481 = vshll.u32 %v441, 8
    %v482 = vand.u32 %v481, 65535
    %v483 = vshrl.u32 %v481, 16
    %v484 = vand.u32 %v480, 65535
    %v485 = vshrl.u32 %v480, 16
    %v486 = vmul.u32 %v482, %v484
    %v487 = vmul.u32 %v482, %v485
    %v488 = vmul.u32 %v483, %v484
    %v489 = vmul.u32 %v483, %v485
    %v490 = vshll.u32 %v487, 16
    %v491 = vshrl.u32 %v487, 16
    %v492 = vshll.u32 %v488, 16
    %v493 = vshrl.u32 %v488, 16
    %vm494 = vc.u32 %v486, %v490
    %v495 = vsel %vm494, 1, 0
    %v496 = vadd.s32 %v486, %v490
    %v497 = vadd.s32 %v489, %v495
    %vm498 = vc.u32 %v496, %v492
    %v499 = vsel %vm498, 1, 0
    %v500 = vadd.s32 %v496, %v492
    %v501 = vadd.s32 %v497, %v499
    %v502 = vadd.s32 %v501, %v491
    %v503 = vadd.s32 %v502, %v493
    %v504 = vand.u32 %v481, 65535
    %v505 = vshrl.u32 %v481, 16
    %v506 = vand.u32 %v476, 65535
    %v507 = vshrl.u32 %v476, 16
    %v508 = vmul.u32 %v504, %v506
    %v509 = vmul.u32 %v504, %v507
    %v510 = vmul.u32 %v505, %v506
    %v511 = vmul.u32 %v505, %v507
    %v512 = vshll.u32 %v509, 16
    %v513 = vshrl.u32 %v509, 16
    %v514 = vshll.u32 %v510, 16
    %v515 = vshrl.u32 %v510, 16
    %vm516 = vc.u32 %v508, %v512
    %v517 = vsel %vm516, 1, 0
    %v518 = vadd.s32 %v508, %v512
    %v519 = vadd.s32 %v511, %v517
    %vm520 = vc.u32 %v518, %v514
    %v521 = vsel %vm520, 1, 0
    %v522 = vadd.s32 %v518, %v514
    %v523 = vadd.s32 %v519, %v521
    %v524 = vadd.s32 %v523, %v513
    %v525 = vadd.s32 %v524, %v515
    %v526 = vmul.u32 %v481, %v472
    %v527 = vadd.s32 %v503, %v522
    %vm528 = vc.u32 %v503, %v522
    %v529 = vadd.s32 %v525, 1
    %v530 = vsel %vm528, %v529, %v525
    %v531 = vadd.s32 %v526, %v530
    %v532 = vadd.s32 %v531, 536870912
    %v533 = vshrl.u32 %v532, 30
    %v534 = vshll.u32 %v533, 30
    %v535 = vsub.s32 %v531, %v534
    %vm536 = vcmp.lt.s32.totalorder %v535, 0
    %v537 = vsub.s32 0, %v535
    %v538 = vsel %vm536, %v537, %v535
    %v539 = vclz %v538
    %v540 = vsub.s32 %v539, 2
    %vm541 = vcmp.gt.s32.totalorder 0, %v540
    %v542 = vsel %vm541, 0, %v540
    %v543 = vsub.s32 32, %v542
    %v544 = vshll.u32 %v535, %v542
    %v545 = vshrl.u32 %v527, %v543
    %v546 = vor.u32 %v544, %v545
    %v547 = vsub.s32 4294967266, %v542
    %v548 = vadd.s32 %v547, 127
    %v549 = vshll.u32 %v548, 23
    %v550 = vor.u32 4788187, %v549
    %v551 = vand.u32 2147483647, %v550
    %v553 = vcvt.s32.f32 %v546
    %v554 = vmul.f32 %v553, %v551
    %v555 = vxor.u32 %v554, 2147483648
    %v556 = vsel %vm435, %v555, %v554
    %v557 = vsub.s32 4, %v533
    %v558 = vsel %vm435, %v557, %v533
    %v559 = vsel %vm434, %v121, %v556
    %v560 = vsel %vm434, 0, %v558
    %v561 = vmul.f32 %v559, %v559
    %v562 = vmul.f32 %v561, -0.001358992
    %v563 = vadd.f32 %v562, 0.041655596
    %v564 = vmul.f32 %v561, %v563
    %v565 = vadd.f32 %v564, -0.4999988
    %v566 = vmul.f32 %v561, %v565
    %v567 = vadd.f32 1.0, %v566
    %v568 = vmul.f32 %v559, %v559
    %v569 = vmul.f32 %v568, -0.00019511016
    %v570 = vadd.f32 %v569, 0.008332121
    %v571 = vmul.f32 %v568, %v570
    %v572 = vadd.f32 %v571, -0.16666654
    %v573 = vmul.f32 %v568, %v572
    %v574 = vadd.f32 %v573, 1.0
    %v575 = vmul.f32 %v574, %v559
    %vm576 = vweird.f32 %v121
    %v577 = vadd.s32 %v560, 3
    %v578 = vand.u32 %v577, 3
    %vm579 = vcmp.lt.s32.totalorder %v578, 2
    %vm580 = vcmp.eq.s32.totalorder %v578, 0
    %v581 = vxor.u32 %v575, 2147483648
    %v582 = vsel %vm580, %v567, %v581
    %vm583 = vcmp.eq.s32.totalorder %v578, 2
    %v584 = vxor.u32 %v567, 2147483648
    %v585 = vsel %vm583, %v584, %v575
    %v586 = vsel %vm579, %v582, %v585
    %v587 = vsel %vm576, nan, %v586
    %v588 = vand.u32 2147483647, %v122
    %vm589 = vcmp.le.f32.partialorder %v588, 0.7853982
    %vm590 = vcmp.lt.s32.totalorder %v122, 0
    %v591 = vand.u32 %v122, 2139095040
    %v592 = vshrl.u32 %v591, 23
    %v593 = vsub.s32 %v592, 127
    %v594 = vand.u32 2147483647, %v122
    %v595 = vand.u32 %v594, 8388607
    %v596 = vor.u32 %v595, 8388608
    %v597 = vsub.s32 0, %v596
    %v598 = vadd.s32 %v593, 1
    %vm599 = vcmp.gt.s32.totalorder %v598, 0
    %v600 = vsel %vm599, %v598, 0
    %v601 = vshrl.u32 %v600, 5
    %v602 = vand.u32 %v600, 31
    %v603 = vsub.s32 32, %v602
    %v604 = vshrl.u32 683565275, %v603
    %v605 = vshll.u32 683565275, %v602
    %v606 = vshrl.u32 2475754826, %v603
    %v607 = vor.u32 %v605, %v606
    %v608 = vshll.u32 2475754826, %v602
    %v609 = vshrl.u32 2131351028, %v603
    %v610 = vor.u32 %v608, %v609
    %v611 = vshll.u32 2131351028, %v602
    %v612 = vshrl.u32 2102212464, %v603
    %v613 = vor.u32 %v611, %v612
    %v614 = vshll.u32 2102212464, %v602
    %v615 = vshrl.u32 920167782, %v603
    %v616 = vor.u32 %v614, %v615
    %v617 = vshll.u32 920167782, %v602
    %v618 = vshrl.u32 1326507024, %v603
    %v619 = vor.u32 %v617, %v618
    %vm620 = vcmp.lt.s32.totalorder %v601, 1
    %vm621 = vcmp.lt.s32.totalorder %v601, 2
    %vm622 = vcmp.lt.s32.totalorder %v601, 3
    %vm623 = vcmp.lt.s32.totalorder %v601, 4
    %v624 = vsel %vm620, %v604, %v607
    %v625 = vsel %vm623, %v613, 2102212464
    %v626 = vsel %vm622, %v610, %v625
    %v627 = vsel %vm621, %v624, %v626
    %v628 = vsel %vm620, %v607, %v610
    %v629 = vsel %vm623, %v616, 920167782
    %v630 = vsel %vm622, %v613, %v629
    %v631 = vsel %vm621, %v628, %v630
    %v632 = vsel %vm620, %v610, %v613
    %v633 = vsel %vm623, %v619, 1326507024
    %v634 = vsel %vm622, %v616, %v633
    %v635 = vsel %vm621, %v632, %v634
    %v636 = vshll.u32 %v596, 8
    %v637 = vand.u32 %v636, 65535
    %v638 = vshrl.u32 %v636, 16
    %v639 = vand.u32 %v635, 65535
    %v640 = vshrl.u32 %v635, 16
    %v641 = vmul.u32 %v637, %v639
    %v642 = vmul.u32 %v637, %v640
    %v643 = vmul.u32 %v638, %v639
    %v644 = vmul.u32 %v638, %v640
    %v645 = vshll.u32 %v642, 16
    %v646 = vshrl.u32 %v642, 16
    %v647 = vshll.u32 %v643, 16
    %v648 = vshrl.u32 %v643, 16
    %vm649 = vc.u32 %v641, %v645
    %v650 = vsel %vm649, 1, 0
    %v651 = vadd.s32 %v641, %v645
    %v652 = vadd.s32 %v644, %v650
    %vm653 = vc.u32 %v651, %v647
    %v654 = vsel %vm653, 1, 0
    %v655 = vadd.s32 %v651, %v647
    %v656 = vadd.s32 %v652, %v654
    %v657 = vadd.s32 %v656, %v646
    %v658 = vadd.s32 %v657, %v648
    %v659 = vand.u32 %v636, 65535
    %v660 = vshrl.u32 %v636, 16
    %v661 = vand.u32 %v631, 65535
    %v662 = vshrl.u32 %v631, 16
    %v663 = vmul.u32 %v659, %v661
    %v664 = vmul.u32 %v659, %v662
    %v665 = vmul.u32 %v660, %v661
    %v666 = vmul.u32 %v660, %v662
    %v667 = vshll.u32 %v664, 16
    %v668 = vshrl.u32 %v664, 16
    %v669 = vshll.u32 %v665, 16
    %v670 = vshrl.u32 %v665, 16
    %vm671 = vc.u32 %v663, %v667
    %v672 = vsel %vm671, 1, 0
    %v673 = vadd.s32 %v663, %v667
    %v674 = vadd.s32 %v666, %v672
    %vm675 = vc.u32 %v673, %v669
    %v676 = vsel %vm675, 1, 0
    %v677 = vadd.s32 %v673, %v669
    %v678 = vadd.s32 %v674, %v676
    %v679 = vadd.s32 %v678, %v668
    %v680 = vadd.s32 %v679, %v670
    %v681 = vmul.u32 %v636, %v627
    %v682 = vadd.s32 %v658, %v677
    %vm683 = vc.u32 %v658, %v677
    %v684 = vadd.s32 %v680, 1
    %v685 = vsel %vm683, %v684, %v680
    %v686 = vadd.s32 %v681, %v685
    %v687 = vadd.s32 %v686, 536870912
    %v688 = vshrl.u32 %v687, 30
    %v689 = vshll.u32 %v688, 30
    %v690 = vsub.s32 %v686, %v689
    %vm691 = vcmp.lt.s32.totalorder %v690, 0
    %v692 = vsub.s32 0, %v690
    %v693 = vsel %vm691, %v692, %v690
    %v694 = vclz %v693
    %v695 = vsub.s32 %v694, 2
    %vm696 = vcmp.gt.s32.totalorder 0, %v695
    %v697 = vsel %vm696, 0, %v695
    %v698 = vsub.s32 32, %v697
    %v699 = vshll.u32 %v690, %v697
    %v700 = vshrl.u32 %v682, %v698
    %v701 = vor.u32 %v699, %v700
    %v702 = vsub.s32 4294967266, %v697
    %v703 = vadd.s32 %v702, 127
    %v704 = vshll.u32 %v703, 23
    %v705 = vor.u32 4788187, %v704
    %v706 = vand.u32 2147483647, %v705
    %v708 = vcvt.s32.f32 %v701
    %v709 = vmul.f32 %v708, %v706
    %v710 = vxor.u32 %v709, 2147483648
    %v711 = vsel %vm590, %v710, %v709
    %v712 = vsub.s32 4, %v688
    %v713 = vsel %vm590, %v712, %v688
    %v714 = vsel %vm589, %v122, %v711
    %v715 = vsel %vm589, 0, %v713
    %v716 = vmul.f32 %v714, %v714
    %v717 = vmul.f32 %v716, -0.001358992
    %v718 = vadd.f32 %v717, 0.041655596
    %v719 = vmul.f32 %v716, %v718
    %v720 = vadd.f32 %v719, -0.4999988
    %v721 = vmul.f32 %v716, %v720
    %v722 = vadd.f32 1.0, %v721
    %v723 = vmul.f32 %v714, %v714
    %v724 = vmul.f32 %v723, -0.00019511016
    %v725 = vadd.f32 %v724, 0.008332121
    %v726 = vmul.f32 %v723, %v725
    %v727 = vadd.f32 %v726, -0.16666654
    %v728 = vmul.f32 %v723, %v727
    %v729 = vadd.f32 %v728, 1.0
    %v730 = vmul.f32 %v729, %v714
    %vm731 = vweird.f32 %v122
    %v732 = vadd.s32 %v715, 3
    %v733 = vand.u32 %v732, 3
    %vm734 = vcmp.lt.s32.totalorder %v733, 2
    %vm735 = vcmp.eq.s32.totalorder %v733, 0
    %v736 = vxor.u32 %v730, 2147483648
    %v737 = vsel %vm735, %v722, %v736
    %vm738 = vcmp.eq.s32.totalorder %v733, 2
    %v739 = vxor.u32 %v722, 2147483648
    %v740 = vsel %vm738, %v739, %v730
    %v741 = vsel %vm734, %v737, %v740
    %v742 = vsel %vm731, nan, %v741
    %v743 = vmul.f32 %v108, %v587
    %v744 = vmul.f32 %v120, %v742
    %v745 = vld [vmem:[#allocation4] sm:$0xff]
    %v746 = vld [vmem:[#allocation4 + $0x8] sm:$0xff]
    %s747 = sld [smem:[#allocation3]]
    %v748 = vstv %s747
    %v749 = vmul.f32 %v748, %v431
    %v750 = vmul.f32 %v748, %v432
    %v751 = vmul.f32 %v748, %v743
    %v752 = vmul.f32 %v748, %v744
    %v757 = vrot.slane %v750, 4
    %v758 = vrot.slane %v752, 4
    %vm759 = vcmask 1043456
    %v760 = vsel %vm759, %v749, %v757
    %v761 = vsel %vm759, %v751, %v758
    %v764 = vadd.f32 %v745, %v760
    %v765 = vadd.f32 %v746, %v761
    %766 = vst [vmem:[#allocation7] sm:$0xff] %v764
    %767 = vst [vmem:[#allocation7 + $0x8] sm:$0xff] %v765
    // Predicated region
    $region18: #{tpu_custom_call.1} parent=1 // pred_check
      _
    $region19: #{tpu_custom_call.1} parent=1 // pred_check_branch
      %769 = sbr.rel (0) target = $region21
    $region20: #{tpu_custom_call.1} parent=1 // pred_region
      %771 = vsyncadd [#allocation6], 0
      %s773 = sshll.u32 [#allocation7], 4
      %s774 = int_to_ptr.vmem [resolvable:$true] %s773
      %s775 = sshll.u32 %s3, 4
      %s776 = int_to_ptr.hbm [resolvable:$true] %s775
      %778 = dma.vmem_to_hbm [thread:$0]  %s774, 256, %s776, [#allocation6]
    $region21: #{tpu_custom_call.1} parent=1 // pred_fallthru
      _
    // Predicated region
    $region22: #{tpu_custom_call.1} parent=1 // pred_check
      _
    $region23: #{tpu_custom_call.1} parent=1 // pred_check_branch
      %780 = sbr.rel (0) target = $region25
    $region24: #{tpu_custom_call.1} parent=1 // pred_region
      %782 = dma.done [#allocation6], 256
    $region25: #{tpu_custom_call.1} parent=1 // pred_fallthru
      _
    %783 = vsyncpa [#allocation5], 1
    %784 = vsyncpa [#allocation6], 1

</llo_original>
